<compile_context>
chip_gen: v7x
topology: tpu7x:2x2x1
jax: 0.10.0
libtpu: 0.0.40
codegen_flags: <defaults>
</compile_context>

<pallas_src>
import jax
import jax.numpy as jnp
from jax.experimental import pallas as pl
from jax.experimental.pallas import tpu as pltpu

LANE = 128           # layer-1 mean half in lanes [0,128), 0.5*logvar half in [128,256)
PACK = 2 * LANE      # lane width of the packed layer-1 matmul output
LV2 = 64             # lane carrying 0.5*fc2_logvar inside the 128-wide layer-2 output


def _round_up(n, m):
    return ((n + m - 1) // m) * m


def mock_bayesian_forward(x, packed_params, eps_packed, *, hidden_size, batch_tile=2048):
    """x: (B, input_size) f32, eps_packed: (B, HP) f32 -> (B, 1) f32."""
    w1p, w2p, bp = packed_params
    B, d_in = x.shape
    HP = eps_packed.shape[1]          # packed width of eps / h (lanes)
    H = hidden_size
    assert H < HP <= LANE
    assert w1p.shape == (d_in, PACK) and w2p.shape == (HP, LANE) and bp.shape == (2, PACK)

    def kernel(x_ref, w1_ref, w2_ref, b_ref, eps_ref, o_ref):
        xt = x_ref[...]              # (TB, d_in)
        eps = eps_ref[...]           # (TB, HP): lanes [0,H) = eps1, lane H = eps2, rest 0
        b = b_ref[...]               # (2, PACK): row 0 -> layer-1 biases, row 1 -> layer-2

        # Layer 1: fc1_mean and 0.5*fc1_logvar in ONE MXU pass (0.5 folded at pack time).
        y1 = jnp.dot(xt, w1_ref[...], preferred_element_type=jnp.float32) + b[0:1, :]
        # Reparameterize: h = mean + exp(0.5*logvar) * eps1.
        # Lanes [H, HP) of h hold exp(0)*eps garbage (incl. eps2 at lane H); the zero rows
        # [H, HP) of w2_ref are what keep that garbage out of the output — do not prune.
        h = y1[:, :HP] + jnp.exp(y1[:, LANE:LANE + HP]) * eps        # (TB, HP)

        # Layer 2: fc2_mean (lane 0) and 0.5*fc2_logvar (lane LV2) in ONE 128-wide MXU pass.
        y2 = jnp.dot(h, w2_ref[...], preferred_element_type=jnp.float32) + b[1:2, :LANE]
        o_ref[...] = y2[:, 0:1] + jnp.exp(y2[:, LV2:LV2 + 1]) * eps[:, H:H + 1]

    # ---- batch tiling -------------------------------------------------------------
    bt = max(8, min(batch_tile, _round_up(B, 8)))
    bt = _round_up(bt, 8)
    # v7x: make sure the ("parallel",) grid axis has >= 2 steps whenever the batch allows,
    # so row tiles are sharded across both TensorCores (harmless no-op on v5e/v6e).
    if _round_up(B, 8) // bt < 2 and _round_up(B, 8) >= 16:
        bt = _round_up(pl.cdiv(_round_up(B, 8), 2), 8)
    Bp = _round_up(B, bt)
    if Bp != B:                                    # pad batch to a tile multiple
        pad = Bp - B
        x = jnp.pad(x, ((0, pad), (0, 0)))
        eps_packed = jnp.pad(eps_packed, ((0, pad), (0, 0)))

    out = pl.pallas_call(
        kernel,
        out_shape=jax.ShapeDtypeStruct((Bp, 1), jnp.float32),
        grid_spec=pltpu.PrefetchScalarGridSpec(
            num_scalar_prefetch=0,
            grid=(Bp // bt,),
            in_specs=[
                pl.BlockSpec((bt, d_in), lambda i: (i, 0)),     # x row tile (streamed)
                pl.BlockSpec(w1p.shape, lambda i: (0, 0)),      # weights/biases: constant
                pl.BlockSpec(w2p.shape, lambda i: (0, 0)),      #   index_map -> stay
                pl.BlockSpec(bp.shape, lambda i: (0, 0)),       #   VMEM-resident
                pl.BlockSpec((bt, HP), lambda i: (i, 0)),       # packed noise row tile
            ],
            out_specs=pl.BlockSpec((bt, 1), lambda i: (i, 0)),
        ),
        compiler_params=pltpu.CompilerParams(
            dimension_semantics=("parallel",),
        ),
    )(x, w1p, w2p, bp, eps_packed)
    return out[:B]


def init_params(key, input_size=10, hidden_size=20):
    """Raw params mimicking torch.nn.Linear default init, stored as (in, out)."""
    keys = jax.random.split(key, 8)

    def lin(kw, kb, fan_in, fan_out):
        bound = 1.0 / jnp.sqrt(fan_in)
        w = jax.random.uniform(kw, (fan_in, fan_out), jnp.float32, -bound, bound)
        b = jax.random.uniform(kb, (1, fan_out), jnp.float32, -bound, bound)
        return w, b

    w1m, b1m = lin(keys[0], keys[1], input_size, hidden_size)
    w1v, b1v = lin(keys[2], keys[3], input_size, hidden_size)
    w2m, b2m = lin(keys[4], keys[5], hidden_size, 1)
    w2v, b2v = lin(keys[6], keys[7], hidden_size, 1)
    return (w1m, b1m, w1v, b1v, w2m, b2m, w2v, b2v)


def pack_params(params, input_size=10, hidden_size=20):
    """One-time packing of the 8 Linear params into 3 kernel operands.

    w1_packed (input_size, 256): lanes [0,H) = W1_mean, lanes [128,128+H) = 0.5*W1_logvar
    w2_packed (HP, 128):         rows [0,H); lane 0 = W2_mean, lane LV2 = 0.5*W2_logvar.
                                 Rows [H, HP) MUST stay zero — they cancel the
                                 reparameterization noise left in h's padding lanes.
    b_packed  (2, 256):          row 0 = layer-1 biases (same lane layout as w1_packed),
                                 row 1 = layer-2 biases (lane 0 / lane LV2).
    """
    assert hidden_size + 1 <= LANE
    HP = _round_up(hidden_size + 1, 8)
    (w1m, b1m, w1v, b1v, w2m, b2m, w2v, b2v) = params

    w1p = jnp.zeros((input_size, PACK), jnp.float32)
    w1p = w1p.at[:, :hidden_size].set(w1m)
    w1p = w1p.at[:, LANE:LANE + hidden_size].set(0.5 * w1v)

    w2p = jnp.zeros((HP, LANE), jnp.float32)
    w2p = w2p.at[:hidden_size, 0].set(w2m[:, 0])
    w2p = w2p.at[:hidden_size, LV2].set(0.5 * w2v[:, 0])

    bp = jnp.zeros((2, PACK), jnp.float32)
    bp = bp.at[0, :hidden_size].set(b1m[0])
    bp = bp.at[0, LANE:LANE + hidden_size].set(0.5 * b1v[0])
    bp = bp.at[1, 0].set(b2m[0, 0])
    bp = bp.at[1, LV2].set(0.5 * b2v[0, 0])
    return w1p, w2p, bp


if __name__ == "__main__":
    input_size, hidden_size, batch = 10, 20, 16
    HP = _round_up(hidden_size + 1, 8)          # 24 lanes: eps1 in [0,20), eps2 at lane 20

    root = jax.random.PRNGKey(0)
    k_param, k_x, k_eps = jax.random.split(root, 3)

    raw_params = init_params(k_param, input_size, hidden_size)
    packed_params = pack_params(raw_params, input_size, hidden_size)

    x = jax.random.normal(k_x, (batch, input_size), jnp.float32)
    # torch.randn_like equivalents, packed into one narrow lane-aligned operand.
    eps_raw = jax.random.normal(k_eps, (batch, hidden_size + 1), jnp.float32)
    eps_packed = jnp.pad(eps_raw, ((0, 0), (0, HP - hidden_size - 1)))

    out = mock_bayesian_forward(x, packed_params, eps_packed, hidden_size=hidden_size)
    out = jax.block_until_ready(out)

    # Pure-JAX reference of the original (unpacked) module math, driven by the same noise.
    (w1m, b1m, w1v, b1v, w2m, b2m, w2v, b2v) = raw_params
    eps1 = eps_packed[:, :hidden_size]
    eps2 = eps_packed[:, hidden_size:hidden_size + 1]
    hp = jax.lax.Precision.HIGHEST
    h_mean = jnp.dot(x, w1m, precision=hp) + b1m
    h_logvar = jnp.dot(x, w1v, precision=hp) + b1v
    h = h_mean + jnp.exp(0.5 * h_logvar) * eps1
    out_mean = jnp.dot(h, w2m, precision=hp) + b2m
    out_logvar = jnp.dot(h, w2v, precision=hp) + b2v
    ref = out_mean + jnp.exp(0.5 * out_logvar) * eps2

    assert out.shape == (batch, 1)
    max_err = float(jnp.max(jnp.abs(out - ref)))
    # Tolerance sized so the check is robust whether the in-kernel f32 matmuls run at full
    # f32 or bf16-pass MXU precision; real layout/packing bugs produce O(1) errors.
    assert jnp.allclose(out, ref, atol=2e-3, rtol=2e-3), max_err

    print("KERNEL_OK")
</pallas_src>

<mosaic_0001>
module attributes {stable_mosaic.version = 11 : i64} {
  func.func @kernel(%arg0: i32, %arg1: memref<8x10xf32, #tpu.memory_space<vmem>>, %arg2: memref<10x256xf32, #tpu.memory_space<vmem>>, %arg3: memref<24x128xf32, #tpu.memory_space<vmem>>, %arg4: memref<2x256xf32, #tpu.memory_space<vmem>>, %arg5: memref<8x24xf32, #tpu.memory_space<vmem>>, %arg6: memref<8x1xf32, #tpu.memory_space<vmem>>) attributes {dimension_semantics = [#tpu.dimension_semantics<parallel>], iteration_bounds = array<i64: 2>, scalar_prefetch = 0 : i64, scratch_operands = 0 : i64, tpu.core_type = #tpu.core_type<tc>, window_params = [{transform_indices = @transform_0, window_bounds = array<i64: 8, 10>}, {pipeline_mode = #tpu.pipeline_mode<synchronous>, transform_indices = @transform_1, window_bounds = array<i64: 10, 256>}, {pipeline_mode = #tpu.pipeline_mode<synchronous>, transform_indices = @transform_2, window_bounds = array<i64: 24, 128>}, {pipeline_mode = #tpu.pipeline_mode<synchronous>, transform_indices = @transform_3, window_bounds = array<i64: 2, 256>}, {transform_indices = @transform_4, window_bounds = array<i64: 8, 24>}, {transform_indices = @transform_5, window_bounds = array<i64: 8, 1>}]} {
    %c0 = arith.constant 0 : index
    %c0_0 = arith.constant 0 : index
    %0 = vector.load %arg1[%c0, %c0_0] : memref<8x10xf32, #tpu.memory_space<vmem>>, vector<8x10xf32>
    %c0_1 = arith.constant 0 : index
    %c0_2 = arith.constant 0 : index
    %1 = vector.load %arg5[%c0_1, %c0_2] : memref<8x24xf32, #tpu.memory_space<vmem>>, vector<8x24xf32>
    %c0_3 = arith.constant 0 : index
    %c0_4 = arith.constant 0 : index
    %2 = vector.load %arg4[%c0_3, %c0_4] : memref<2x256xf32, #tpu.memory_space<vmem>>, vector<2x256xf32>
    %c0_5 = arith.constant 0 : index
    %c0_6 = arith.constant 0 : index
    %3 = vector.load %arg2[%c0_5, %c0_6] : memref<10x256xf32, #tpu.memory_space<vmem>>, vector<10x256xf32>
    %cst = arith.constant dense<0.000000e+00> : vector<8x256xf32>
    %4 = tpu.matmul %0, %3, %cst {dimension_numbers = #tpu.dot_dimension_numbers<[1], [0], [0], [1], [0, 0, 1, 1], [], []>} : vector<8x10xf32>, vector<10x256xf32>, vector<8x256xf32> -> vector<8x256xf32>
    %5 = vector.extract_strided_slice %2 {offsets = [0, 0], sizes = [1, 256], strides = [1, 1]} : vector<2x256xf32> to vector<1x256xf32>
    %6 = vector.broadcast %5 : vector<1x256xf32> to vector<8x256xf32>
    %7 = arith.addf %4, %6 : vector<8x256xf32>
    %8 = vector.extract_strided_slice %7 {offsets = [0, 0], sizes = [8, 24], strides = [1, 1]} : vector<8x256xf32> to vector<8x24xf32>
    %9 = vector.extract_strided_slice %7 {offsets = [0, 128], sizes = [8, 24], strides = [1, 1]} : vector<8x256xf32> to vector<8x24xf32>
    %10 = math.exp %9 : vector<8x24xf32>
    %11 = arith.mulf %10, %1 : vector<8x24xf32>
    %12 = arith.addf %8, %11 : vector<8x24xf32>
    %c0_7 = arith.constant 0 : index
    %c0_8 = arith.constant 0 : index
    %13 = vector.load %arg3[%c0_7, %c0_8] : memref<24x128xf32, #tpu.memory_space<vmem>>, vector<24x128xf32>
    %cst_9 = arith.constant dense<0.000000e+00> : vector<8x128xf32>
    %14 = tpu.matmul %12, %13, %cst_9 {dimension_numbers = #tpu.dot_dimension_numbers<[1], [0], [0], [1], [0, 0, 1, 1], [], []>} : vector<8x24xf32>, vector<24x128xf32>, vector<8x128xf32> -> vector<8x128xf32>
    %15 = vector.extract_strided_slice %2 {offsets = [1, 0], sizes = [1, 128], strides = [1, 1]} : vector<2x256xf32> to vector<1x128xf32>
    %16 = vector.broadcast %15 : vector<1x128xf32> to vector<8x128xf32>
    %17 = arith.addf %14, %16 : vector<8x128xf32>
    %18 = vector.extract_strided_slice %17 {offsets = [0, 0], sizes = [8, 1], strides = [1, 1]} : vector<8x128xf32> to vector<8x1xf32>
    %19 = vector.extract_strided_slice %17 {offsets = [0, 64], sizes = [8, 1], strides = [1, 1]} : vector<8x128xf32> to vector<8x1xf32>
    %20 = math.exp %19 : vector<8x1xf32>
    %21 = vector.extract_strided_slice %1 {offsets = [0, 20], sizes = [8, 1], strides = [1, 1]} : vector<8x24xf32> to vector<8x1xf32>
    %22 = arith.mulf %20, %21 : vector<8x1xf32>
    %23 = arith.addf %18, %22 : vector<8x1xf32>
    %c0_10 = arith.constant 0 : index
    %c0_11 = arith.constant 0 : index
    %24 = vector.load %arg6[%c0_10, %c0_11] : memref<8x1xf32, #tpu.memory_space<vmem>>, vector<8x1xf32>
    tpu.vector_store %arg6[%c0_10, %c0_11], %23 {strides = array<i32>} : memref<8x1xf32, #tpu.memory_space<vmem>>, vector<8x1xf32>,
    return
  }
  func.func @transform_0(%arg0: i32) -> (i32, i32) {
    %c0_i32 = arith.constant 0 : i32
    %c0_i32_0 = arith.constant 0 : i32
    return %arg0, %c0_i32 : i32, i32
  }
  func.func @transform_1(%arg0: i32) -> (i32, i32) {
    %c0_i32 = arith.constant 0 : i32
    %c0_i32_0 = arith.constant 0 : i32
    %c0_i32_1 = arith.constant 0 : i32
    return %c0_i32, %c0_i32_0 : i32, i32
  }
  func.func @transform_2(%arg0: i32) -> (i32, i32) {
    %c0_i32 = arith.constant 0 : i32
    %c0_i32_0 = arith.constant 0 : i32
    %c0_i32_1 = arith.constant 0 : i32
    return %c0_i32, %c0_i32_0 : i32, i32
  }
  func.func @transform_3(%arg0: i32) -> (i32, i32) {
    %c0_i32 = arith.constant 0 : i32
    %c0_i32_0 = arith.constant 0 : i32
    %c0_i32_1 = arith.constant 0 : i32
    return %c0_i32, %c0_i32_0 : i32, i32
  }
  func.func @transform_4(%arg0: i32) -> (i32, i32) {
    %c0_i32 = arith.constant 0 : i32
    %c0_i32_0 = arith.constant 0 : i32
    return %arg0, %c0_i32 : i32, i32
  }
  func.func @transform_5(%arg0: i32) -> (i32, i32) {
    %c0_i32 = arith.constant 0 : i32
    %c0_i32_0 = arith.constant 0 : i32
    return %arg0, %c0_i32 : i32, i32
  }
}

</mosaic_0001>

<llo_original>
// kernel: tpu_custom_call.1
$region0: #{tpu_custom_call.1}
  #allocation0 [shape = 'u32[]', space=smem, size = 0x4, offset = 0x4, fixed_abs, tag = 'smem constant byte address 0x4 - core index']
  #allocation1 [shape = 'u32[144,128]{1,0:T(1,128)}', space=vmem, size = 0x12000, scoped, tag = 'internal scratch']
  %s0 = inlined_call_operand.hbm [shape: f32[16,10], index: 0, kind: input, shape index: {}]
  %s1 = inlined_call_operand.hbm [shape: f32[10,256], index: 1, kind: input, shape index: {}]
  %s2 = inlined_call_operand.hbm [shape: f32[24,128], index: 2, kind: input, shape index: {}]
  %s3 = inlined_call_operand.vmem [shape: f32[2,256], index: 3, kind: input, shape index: {}]
  %s4 = inlined_call_operand.hbm [shape: f32[16,24], index: 4, kind: input, shape index: {}]
  %s5 = inlined_call_operand.vmem [shape: f32[16,1], index: 5, kind: output, shape index: {}]
  %s6 = sld [smem:[#allocation0]]
  $region69: #{tpu_custom_call.1} parent=0
    _
  %s8 = ssub.s32 1, %s6
  %s9 = scalar_select 0, %s8, %s6
  $region1: #{tpu_custom_call.1} parent=0
    #allocation2 [shape = 'u8[8192]{0}', space=vmem, size = 0x2000, scoped, tag = 'input window, operand 0']
    #allocation3 [shape = 's32[2]{0}', space=sflag, size = 0x8, scoped, tag = 'scoped memory for tpu_custom_call.1']
    #allocation4 [shape = 'u8[16384]{0}', space=vmem, size = 0x4000, scoped, tag = 'input window, operand 1, single buffered']
    #allocation5 [shape = 's32[1]{0}', space=sflag, size = 0x4, scoped, tag = 'scoped memory for tpu_custom_call.1']
    #allocation6 [shape = 'u8[12288]{0}', space=vmem, size = 0x3000, scoped, tag = 'input window, operand 2, single buffered']
    #allocation7 [shape = 'u8[8192]{0}', space=vmem, size = 0x2000, scoped, tag = 'input window, operand 4']
    #allocation8 [shape = 's32[2]{0}', space=sflag, size = 0x8, scoped, tag = 'scoped memory for tpu_custom_call.1']
    %10 = vsyncpa [#allocation3], 0
    %s11 = scalar_lea.sflag [#allocation3], 1
    %12 = vsyncpa %s11, 0
    %13 = vsyncpa [#allocation5], 0
    %14 = vsyncpa [#allocation8], 0
    %s15 = scalar_lea.sflag [#allocation8], 1
    %16 = vsyncpa %s15, 0
    loop: start=0, step=1, limit=4
    $region2: #{tpu_custom_call.1} parent=1 // loop_pre_header
      _
    $region3: #{tpu_custom_call.1} parent=1 // loop_header
      %s18 = sphi 0, %s22
      %p19 = scmp.ge.s32.totalorder %s18, 4
      %s28 = sphi 0, %s30
      %s31 = sphi 0, %s28
      %s32 = sphi 0, %s31
      %s48 = sphi 0, %s32
      %s52 = sphi 0, %s52
      %s54 = sphi 0, %s52
      %s55 = sphi 0, %s54
      %s69 = sphi 0, %s55
      %s73 = sphi 0, %s73
      %s75 = sphi 0, %s73
      %s76 = sphi 0, %s75
      %s90 = sphi 0, %s76
      %s94 = sphi 0, %s94
      %s96 = sphi 0, %s94
      %s97 = sphi 0, %s96
      %s111 = sphi 0, %s97
      %s117 = sphi 0, %s119
      %s120 = sphi 0, %s117
      %s121 = sphi 0, %s120
      %s137 = sphi 0, %s121
      %s143 = sphi 0, %s145
      %s146 = sphi 0, %s143
      %s147 = sphi 0, %s146
      %s163 = sphi 0, %s147
    $region4: #{tpu_custom_call.1} parent=1 // loop_header_branch
      %21 = sbr.rel (%p19) target = $region8
    $region5: #{tpu_custom_call.1} parent=1 // loop_body
      %s23 = ssub.s32 %s18, 1
      %s24 = ssub.s32 %s18, 2
      %s25 = sadd.s32 %s18, 1
      %s26 = ssub.s32 %s18, %s25
      %p27 = scmp.eq.s32.totalorder %s26, 0
      %s29 = sadd.s32 %s28, 1
      %s30 = scalar_select %p27, %s28, %s29
      %p33 = pneg %p27
      %p34 = scmp.eq.s32.totalorder %s18, 1
      %p35 = por %p33, %p34
      %p36 = scmp.ne.s32.totalorder %s28, %s31
      %p37 = scmp.eq.s32.totalorder %s18, 0
      %p38 = por %p36, %p37
      %p39 = scmp.ne.s32.totalorder %s28, %s31
      %p40 = scmp.eq.s32.totalorder %s23, 1
      %p41 = por %p39, %p40
      %p42 = scmp.ne.s32.totalorder %s31, %s32
      %p43 = scmp.eq.s32.totalorder %s23, 0
      %p44 = por %p42, %p43
      %p45 = scmp.ne.s32.totalorder %s31, %s32
      %p46 = scmp.eq.s32.totalorder %s24, 1
      %p47 = por %p45, %p46
      %p49 = scmp.ne.s32.totalorder %s32, %s48
      %p50 = scmp.eq.s32.totalorder %s24, 0
      %p51 = por %p49, %p50
      %s53 = sadd.s32 %s52, 1
      %p56 = scmp.eq.s32.totalorder %s18, 1
      %p57 = scmp.ne.s32.totalorder %s52, %s54
      %p58 = scmp.eq.s32.totalorder %s18, 0
      %p59 = por %p57, %p58
      %p60 = scmp.ne.s32.totalorder %s52, %s54
      %p61 = scmp.eq.s32.totalorder %s23, 1
      %p62 = por %p60, %p61
      %p63 = scmp.ne.s32.totalorder %s54, %s55
      %p64 = scmp.eq.s32.totalorder %s23, 0
      %p65 = por %p63, %p64
      %p66 = scmp.ne.s32.totalorder %s54, %s55
      %p67 = scmp.eq.s32.totalorder %s24, 1
      %p68 = por %p66, %p67
      %p70 = scmp.ne.s32.totalorder %s55, %s69
      %p71 = scmp.eq.s32.totalorder %s24, 0
      %p72 = por %p70, %p71
      %s74 = sadd.s32 %s73, 1
      %p77 = scmp.eq.s32.totalorder %s18, 1
      %p78 = scmp.ne.s32.totalorder %s73, %s75
      %p79 = scmp.eq.s32.totalorder %s18, 0
      %p80 = por %p78, %p79
      %p81 = scmp.ne.s32.totalorder %s73, %s75
      %p82 = scmp.eq.s32.totalorder %s23, 1
      %p83 = por %p81, %p82
      %p84 = scmp.ne.s32.totalorder %s75, %s76
      %p85 = scmp.eq.s32.totalorder %s23, 0
      %p86 = por %p84, %p85
      %p87 = scmp.ne.s32.totalorder %s75, %s76
      %p88 = scmp.eq.s32.totalorder %s24, 1
      %p89 = por %p87, %p88
      %p91 = scmp.ne.s32.totalorder %s76, %s90
      %p92 = scmp.eq.s32.totalorder %s24, 0
      %p93 = por %p91, %p92
      %s95 = sadd.s32 %s94, 1
      %p98 = scmp.eq.s32.totalorder %s18, 1
      %p99 = scmp.ne.s32.totalorder %s94, %s96
      %p100 = scmp.eq.s32.totalorder %s18, 0
      %p101 = por %p99, %p100
      %p102 = scmp.ne.s32.totalorder %s94, %s96
      %p103 = scmp.eq.s32.totalorder %s23, 1
      %p104 = por %p102, %p103
      %p105 = scmp.ne.s32.totalorder %s96, %s97
      %p106 = scmp.eq.s32.totalorder %s23, 0
      %p107 = por %p105, %p106
      %p108 = scmp.ne.s32.totalorder %s96, %s97
      %p109 = scmp.eq.s32.totalorder %s24, 1
      %p110 = por %p108, %p109
      %p112 = scmp.ne.s32.totalorder %s97, %s111
      %p113 = scmp.eq.s32.totalorder %s24, 0
      %p114 = por %p112, %p113
      %s115 = ssub.s32 %s18, %s25
      %p116 = scmp.eq.s32.totalorder %s115, 0
      %s118 = sadd.s32 %s117, 1
      %s119 = scalar_select %p116, %s117, %s118
      %p122 = pneg %p116
      %p123 = scmp.eq.s32.totalorder %s18, 1
      %p124 = por %p122, %p123
      %p125 = scmp.ne.s32.totalorder %s117, %s120
      %p126 = scmp.eq.s32.totalorder %s18, 0
      %p127 = por %p125, %p126
      %p128 = scmp.ne.s32.totalorder %s117, %s120
      %p129 = scmp.eq.s32.totalorder %s23, 1
      %p130 = por %p128, %p129
      %p131 = scmp.ne.s32.totalorder %s120, %s121
      %p132 = scmp.eq.s32.totalorder %s23, 0
      %p133 = por %p131, %p132
      %p134 = scmp.ne.s32.totalorder %s120, %s121
      %p135 = scmp.eq.s32.totalorder %s24, 1
      %p136 = por %p134, %p135
      %p138 = scmp.ne.s32.totalorder %s121, %s137
      %p139 = scmp.eq.s32.totalorder %s24, 0
      %p140 = por %p138, %p139
      %s141 = ssub.s32 %s18, %s25
      %p142 = scmp.eq.s32.totalorder %s141, 0
      %s144 = sadd.s32 %s143, 1
      %s145 = scalar_select %p142, %s143, %s144
      %p148 = pneg %p142
      %p149 = scmp.eq.s32.totalorder %s18, 1
      %p150 = por %p148, %p149
      %p151 = scmp.ne.s32.totalorder %s143, %s146
      %p152 = scmp.eq.s32.totalorder %s18, 0
      %p153 = por %p151, %p152
      %p154 = scmp.ne.s32.totalorder %s143, %s146
      %p155 = scmp.eq.s32.totalorder %s23, 1
      %p156 = por %p154, %p155
      %p157 = scmp.ne.s32.totalorder %s146, %s147
      %p158 = scmp.eq.s32.totalorder %s23, 0
      %p159 = por %p157, %p158
      %p160 = scmp.ne.s32.totalorder %s146, %s147
      %p161 = scmp.eq.s32.totalorder %s24, 1
      %p162 = por %p160, %p161
      %p164 = scmp.ne.s32.totalorder %s147, %s163
      %p165 = scmp.eq.s32.totalorder %s24, 0
      %p166 = por %p164, %p165
      %p167 = scmp.le.s32.totalorder 1, %s18
      %p168 = scmp.lt.s32.totalorder %s18, 3
      %p169 = pnand %p167, %p168
      %p170 = pneg %p169
      // Predicated region
      $region9: #{tpu_custom_call.1} parent=5 // pred_check
        _
      $region10: #{tpu_custom_call.1} parent=5 // pred_check_branch
        %172 = sbr.rel (%p169) target = $region12
      $region11: #{tpu_custom_call.1} parent=5 // pred_region
        %s173 = ssub.s32 %s18, 1
        // Predicated region
        $region13: #{tpu_custom_call.1} parent=11 // pred_check
          %p174 = pneg %p65
        $region14: #{tpu_custom_call.1} parent=11 // pred_check_branch
          %176 = sbr.rel (%p174) target = $region16
        $region15: #{tpu_custom_call.1} parent=11 // pred_region
          %s178 = ssub.s32 512, 512
          %179 = vsyncadd [#allocation5], %s178
          %s180 = sshll.u32 [#allocation4], 4
          %s181 = int_to_ptr.vmem [resolvable:$true] %s180
          %186 = dma.hbm_to_vmem [thread:$0]  %s1, 512, %s181, [#allocation5], 256, 256, 16
        $region16: #{tpu_custom_call.1} parent=11 // pred_fallthru
          _
        // Predicated region
        $region17: #{tpu_custom_call.1} parent=11 // pred_check
          %p187 = pneg %p86
        $region18: #{tpu_custom_call.1} parent=11 // pred_check_branch
          %189 = sbr.rel (%p187) target = $region20
        $region19: #{tpu_custom_call.1} parent=11 // pred_region
          %s191 = ssub.s32 384, 384
          %192 = vsyncadd [#allocation5], %s191
          %s193 = sshll.u32 [#allocation6], 4
          %s194 = int_to_ptr.vmem [resolvable:$true] %s193
          %199 = dma.hbm_to_vmem [thread:$0]  %s2, 384, %s194, [#allocation5], 128, 128, 8
        $region20: #{tpu_custom_call.1} parent=11 // pred_fallthru
          _
        // Predicated region
        $region21: #{tpu_custom_call.1} parent=11 // pred_check
          %p200 = pneg %p107
        $region22: #{tpu_custom_call.1} parent=11 // pred_check_branch
          %202 = sbr.rel (%p200) target = $region24
        $region23: #{tpu_custom_call.1} parent=11 // pred_region
          _
        $region24: #{tpu_custom_call.1} parent=11 // pred_fallthru
          _
      $region12: #{tpu_custom_call.1} parent=5 // pred_fallthru
        _
      %p203 = scmp.lt.s32.totalorder %s18, 2
      // Predicated region
      $region25: #{tpu_custom_call.1} parent=5 // pred_check
        %p204 = pneg %p203
      $region26: #{tpu_custom_call.1} parent=5 // pred_check_branch
        %206 = sbr.rel (%p204) target = $region28
      $region27: #{tpu_custom_call.1} parent=5 // pred_region
        // Predicated region
        $region29: #{tpu_custom_call.1} parent=27 // pred_check
          %p207 = pneg %p38
        $region30: #{tpu_custom_call.1} parent=27 // pred_check_branch
          %209 = sbr.rel (%p207) target = $region32
        $region31: #{tpu_custom_call.1} parent=27 // pred_region
          %s210 = sand.u32 %s28, 1
          %s211 = scalar_lea.sflag [#allocation3], %s210
          %s212 = sand.u32 %s28, 1
          %s213 = smul.addr %s212, 8
          %s214 = scalar_lea.vmem [#allocation2], %s213
          %s216 = ssub.s32 128, 128
          %217 = vsyncadd %s211, %s216
          %s218 = smul.addr %s18, 128
          %s219 = scalar_lea.hbm %s0, %s218
          %s221 = sshll.u32 %s214, 4
          %s222 = int_to_ptr.vmem [resolvable:$true] %s221
          %224 = dma.hbm_to_vmem [thread:$0]  %s219, 128, %s222, %s211
        $region32: #{tpu_custom_call.1} parent=27 // pred_fallthru
          _
        // Predicated region
        $region33: #{tpu_custom_call.1} parent=27 // pred_check
          %p225 = pneg %p127
        $region34: #{tpu_custom_call.1} parent=27 // pred_check_branch
          %227 = sbr.rel (%p225) target = $region36
        $region35: #{tpu_custom_call.1} parent=27 // pred_region
          %s228 = sand.u32 %s117, 1
          %s229 = scalar_lea.sflag [#allocation8], %s228
          %s230 = sand.u32 %s117, 1
          %s231 = smul.addr %s230, 8
          %s232 = scalar_lea.vmem [#allocation7], %s231
          %s234 = ssub.s32 128, 128
          %235 = vsyncadd %s229, %s234
          %s236 = smul.addr %s18, 128
          %s237 = scalar_lea.hbm %s4, %s236
          %s239 = sshll.u32 %s232, 4
          %s240 = int_to_ptr.vmem [resolvable:$true] %s239
          %242 = dma.hbm_to_vmem [thread:$0]  %s237, 128, %s240, %s229
        $region36: #{tpu_custom_call.1} parent=27 // pred_fallthru
          _
      $region28: #{tpu_custom_call.1} parent=5 // pred_fallthru
        _
      %p243 = scmp.le.s32.totalorder 1, %s18
      %p244 = scmp.lt.s32.totalorder %s18, 3
      %p245 = pnand %p243, %p244
      %p246 = pneg %p245
      // Predicated region
      $region37: #{tpu_custom_call.1} parent=5 // pred_check
        _
      $region38: #{tpu_custom_call.1} parent=5 // pred_check_branch
        %248 = sbr.rel (%p245) target = $region40
      $region39: #{tpu_custom_call.1} parent=5 // pred_region
        %s249 = ssub.s32 %s18, 1
        %s250 = sand.u32 %s31, 1
        %s251 = scalar_lea.sflag [#allocation3], %s250
        %s252 = sand.u32 %s31, 1
        %s253 = smul.addr %s252, 8
        %s254 = scalar_lea.vmem [#allocation2], %s253
        // Predicated region
        $region41: #{tpu_custom_call.1} parent=39 // pred_check
          %p255 = pneg %p44
        $region42: #{tpu_custom_call.1} parent=39 // pred_check_branch
          %257 = sbr.rel (%p255) target = $region44
        $region43: #{tpu_custom_call.1} parent=39 // pred_region
          %258 = dma.done %s251, 128
        $region44: #{tpu_custom_call.1} parent=39 // pred_fallthru
          _
        // Predicated region
        $region45: #{tpu_custom_call.1} parent=39 // pred_check
          %p259 = pneg %p65
        $region46: #{tpu_custom_call.1} parent=39 // pred_check_branch
          %261 = sbr.rel (%p259) target = $region48
        $region47: #{tpu_custom_call.1} parent=39 // pred_region
          %262 = dma.done [#allocation5], 512
        $region48: #{tpu_custom_call.1} parent=39 // pred_fallthru
          _
        // Predicated region
        $region49: #{tpu_custom_call.1} parent=39 // pred_check
          %p263 = pneg %p86
        $region50: #{tpu_custom_call.1} parent=39 // pred_check_branch
          %265 = sbr.rel (%p263) target = $region52
        $region51: #{tpu_custom_call.1} parent=39 // pred_region
          %266 = dma.done [#allocation5], 384
        $region52: #{tpu_custom_call.1} parent=39 // pred_fallthru
          _
        %s267 = sand.u32 %s120, 1
        %s268 = scalar_lea.sflag [#allocation8], %s267
        %s269 = sand.u32 %s120, 1
        %s270 = smul.addr %s269, 8
        %s271 = scalar_lea.vmem [#allocation7], %s270
        // Predicated region
        $region53: #{tpu_custom_call.1} parent=39 // pred_check
          %p272 = pneg %p133
        $region54: #{tpu_custom_call.1} parent=39 // pred_check_branch
          %274 = sbr.rel (%p272) target = $region56
        $region55: #{tpu_custom_call.1} parent=39 // pred_region
          %275 = dma.done %s268, 128
        $region56: #{tpu_custom_call.1} parent=39 // pred_fallthru
          _
        %s276 = sand.u32 %s31, 1
        %s277 = scalar_lea.sflag [#allocation3], %s276
        %s278 = sand.u32 %s31, 1
        %s279 = smul.addr %s278, 8
        %s280 = scalar_lea.vmem [#allocation2], %s279
        %p281 = pneg %p44
        %p282 = pneg %p41
        %p283 = pneg %p65
        %p284 = pneg %p62
        %p285 = pneg %p86
        %p286 = pneg %p83
        %p287 = pneg %p107
        %p288 = pneg %p104
        %s289 = sand.u32 %s120, 1
        %s290 = scalar_lea.sflag [#allocation8], %s289
        %s291 = sand.u32 %s120, 1
        %s292 = smul.addr %s291, 8
        %s293 = scalar_lea.vmem [#allocation7], %s292
        %p294 = pneg %p133
        %p295 = pneg %p130
        %p296 = pneg %p159
        %p297 = pneg %p156
        %p298 = scmp.lt.s32.totalorder %s23, 1
        %s299 = scalar_select %p298, %s23, 1
        %s300 = smul.addr %s299, 8
        %s301 = scalar_lea.vmem %s5, %s300
        %p302 = scmp.lt.s32.totalorder %s23, 1
        %s303 = scalar_select %p302, %s23, 1
        %s304 = smul.addr %s303, 8
        %s305 = scalar_lea.vmem %s5, %s304
        %v306 = vld [vmem:[%s254] sm:$0xff]
        %v307 = vld [vmem:[%s271] sm:$0xff]
        %v308 = vld [vmem:[%s3] sm:$0xf]
        %v309 = vld [vmem:[#allocation4] sm:$0xff]
        %v310 = vld [vmem:[#allocation4 + $0x8] sm:$0xff]
        %v311 = vld [vmem:[#allocation4 + $0x10] sm:$0x3]
        %v312 = vld [vmem:[#allocation4 + $0x18] sm:$0x3]
        %v314 = vlaneseq
        %v315 = vshrl.u32 %v314, 7
        %v316 = vsub.s32 0, %v315
        %v317 = vrot.slane %v308, %v316
        %v318 = vlaneseq
        %v319 = vshrl.u32 %v318, 7
        %v320 = vsub.s32 2, %v319
        %v321 = vrot.slane %v308, %v320
        %v324 = vlaneseq
        %v325 = vshrl.u32 %v324, 7
        %v326 = vsub.s32 0, %v325
        %v327 = vrot.slane %v317, %v326
        %v328 = vlaneseq
        %v329 = vshrl.u32 %v328, 7
        %v330 = vsub.s32 0, %v329
        %v331 = vrot.slane %v321, %v330
        %vm332 = vcmask 80896
        %v334 = vsel %vm332, %v306, 0
        %vm336 = vcmask 1041408
        %v338 = vsel %vm336, %v311, 0
        %v341 = vsel %vm336, %v312, 0
        %343 = vmatprep.subr.mxu0 %v310
        %344 = vmatpush1.msra.mxu0 %v309
        %345 = vmatprep.subr.mxu0 %v341
        %346 = vmatpush1.msra.mxu0 %v338
        %347 = vmatprep.subr.mxu0 0.0
        %348 = vmatpush1.msra.mxu0 0.0
        %349 = vmatprep.subr.mxu0 0.0
        %350 = vmatpush1.msra.mxu0 0.0
        %351 = vmatprep.subr.mxu0 0.0
        %352 = vmatpush1.msra.mxu0 0.0
        %353 = vmatprep.subr.mxu0 0.0
        %354 = vmatpush1.msra.mxu0 0.0
        %355 = vmatprep.subr.mxu0 0.0
        %356 = vmatpush1.msra.mxu0 0.0
        %357 = vmatprep.subr.mxu0 0.0
        %358 = vmatpush1.msra.mxu0 0.0
        %359 = vmatprep.subr.mxu0 0.0
        %360 = vmatpush1.msra.mxu0 0.0
        %361 = vmatprep.subr.mxu0 0.0
        %362 = vmatpush1.msra.mxu0 0.0
        %363 = vmatprep.subr.mxu0 0.0
        %364 = vmatpush1.msra.mxu0 0.0
        %365 = vmatprep.subr.mxu0 0.0
        %366 = vmatpush1.msra.mxu0 0.0
        %367 = vmatprep.subr.mxu0 0.0
        %368 = vmatpush1.msra.mxu0 0.0
        %369 = vmatprep.subr.mxu0 0.0
        %370 = vmatpush1.msra.mxu0 0.0
        %371 = vmatprep.subr.mxu0 0.0
        %372 = vmatpush1.msra.mxu0 0.0
        %373 = vmatprep.subr.mxu0 0.0
        %374 = vmatpush1.msra.mxu0 0.0
        %375 = vmatprep.subr.mxu0 0.0
        %376 = vmatpush1.msra.mxu0 0.0
        %377 = vmatprep.subr.mxu0 0.0
        %378 = vmatpush1.msra.mxu0 0.0
        %379 = vmatprep.subr.mxu0 0.0
        %380 = vmatpush1.msra.mxu0 0.0
        %381 = vmatprep.subr.mxu0 0.0
        %382 = vmatpush1.msra.mxu0 0.0
        %383 = vmatprep.subr.mxu0 0.0
        %384 = vmatpush1.msra.mxu0 0.0
        %385 = vmatprep.subr.mxu0 0.0
        %386 = vmatpush1.msra.mxu0 0.0
        %387 = vmatprep.subr.mxu0 0.0
        %388 = vmatpush1.msra.mxu0 0.0
        %389 = vmatprep.subr.mxu0 0.0
        %390 = vmatpush1.msra.mxu0 0.0
        %391 = vmatprep.subr.mxu0 0.0
        %392 = vmatpush1.msra.mxu0 0.0
        %393 = vmatprep.subr.mxu0 0.0
        %394 = vmatpush1.msra.mxu0 0.0
        %395 = vmatprep.subr.mxu0 0.0
        %396 = vmatpush1.msra.mxu0 0.0
        %397 = vmatprep.subr.mxu0 0.0
        %398 = vmatpush1.msra.mxu0 0.0
        %399 = vmatprep.subr.mxu0 0.0
        %400 = vmatpush1.msra.mxu0 0.0
        %401 = vmatprep.subr.mxu0 0.0
        %402 = vmatpush1.msra.mxu0 0.0
        %403 = vmatprep.subr.mxu0 0.0
        %404 = vmatpush1.msra.mxu0 0.0
        %405 = vmatprep.subr.mxu0 0.0
        %406 = vmatpush1.msra.mxu0 0.0
        %407 = vmatprep.mubr.f32.mxu0 0.0
        %408 = vmatmul.mubr.f32.gmra.mrb[0].mxu0 %v334
        %v409 = vpop.f32.mrb[0].mxu0
        %v410 = vadd.f32 %v327, %v409
        %v411 = vpop.f32.mrb[0].mxu0
        %v412 = vadd.f32 %v331, %v411
        %413 = vdwg.mxu0
        %v414 = vmul.f32 %v412, 1.442695
        %v415 = vpow.pop %v414
        %v416 = vmul.f32 %v415, %v307
        %v417 = vadd.f32 %v410, %v416
        %v418 = vld [vmem:[#allocation6] sm:$0xff]
        %v419 = vld [vmem:[#allocation6 + $0x8] sm:$0xff]
        %v420 = vld [vmem:[#allocation6 + $0x10] sm:$0xff]
        %v421 = vlaneseq
        %v422 = vshrl.u32 %v421, 7
        %v423 = vsub.s32 1, %v422
        %v424 = vrot.slane %v308, %v423
        %vm425 = vcmask 195584
        %v427 = vsel %vm425, %v417, 0
        %429 = vmatprep.subr.mxu0 0.0
        %430 = vmatpush1.msra.mxu0 %v418
        %431 = vmatprep.subr.mxu0 0.0
        %432 = vmatpush1.msra.mxu0 %v419
        %433 = vmatprep.subr.mxu0 0.0
        %434 = vmatpush1.msra.mxu0 %v420
        %435 = vmatprep.subr.mxu0 0.0
        %436 = vmatpush1.msra.mxu0 0.0
        %437 = vmatprep.subr.mxu0 0.0
        %438 = vmatpush1.msra.mxu0 0.0
        %439 = vmatprep.subr.mxu0 0.0
        %440 = vmatpush1.msra.mxu0 0.0
        %441 = vmatprep.subr.mxu0 0.0
        %442 = vmatpush1.msra.mxu0 0.0
        %443 = vmatprep.subr.mxu0 0.0
        %444 = vmatpush1.msra.mxu0 0.0
        %445 = vmatprep.subr.mxu0 0.0
        %446 = vmatpush1.msra.mxu0 0.0
        %447 = vmatprep.subr.mxu0 0.0
        %448 = vmatpush1.msra.mxu0 0.0
        %449 = vmatprep.subr.mxu0 0.0
        %450 = vmatpush1.msra.mxu0 0.0
        %451 = vmatprep.subr.mxu0 0.0
        %452 = vmatpush1.msra.mxu0 0.0
        %453 = vmatprep.subr.mxu0 0.0
        %454 = vmatpush1.msra.mxu0 0.0
        %455 = vmatprep.subr.mxu0 0.0
        %456 = vmatpush1.msra.mxu0 0.0
        %457 = vmatprep.subr.mxu0 0.0
        %458 = vmatpush1.msra.mxu0 0.0
        %459 = vmatprep.subr.mxu0 0.0
        %460 = vmatpush1.msra.mxu0 0.0
        %461 = vmatprep.subr.mxu0 0.0
        %462 = vmatpush1.msra.mxu0 0.0
        %463 = vmatprep.subr.mxu0 0.0
        %464 = vmatpush1.msra.mxu0 0.0
        %465 = vmatprep.subr.mxu0 0.0
        %466 = vmatpush1.msra.mxu0 0.0
        %467 = vmatprep.subr.mxu0 0.0
        %468 = vmatpush1.msra.mxu0 0.0
        %469 = vmatprep.subr.mxu0 0.0
        %470 = vmatpush1.msra.mxu0 0.0
        %471 = vmatprep.subr.mxu0 0.0
        %472 = vmatpush1.msra.mxu0 0.0
        %473 = vmatprep.subr.mxu0 0.0
        %474 = vmatpush1.msra.mxu0 0.0
        %475 = vmatprep.subr.mxu0 0.0
        %476 = vmatpush1.msra.mxu0 0.0
        %477 = vmatprep.subr.mxu0 0.0
        %478 = vmatpush1.msra.mxu0 0.0
        %479 = vmatprep.subr.mxu0 0.0
        %480 = vmatpush1.msra.mxu0 0.0
        %481 = vmatprep.subr.mxu0 0.0
        %482 = vmatpush1.msra.mxu0 0.0
        %483 = vmatprep.subr.mxu0 0.0
        %484 = vmatpush1.msra.mxu0 0.0
        %485 = vmatprep.subr.mxu0 0.0
        %486 = vmatpush1.msra.mxu0 0.0
        %487 = vmatprep.subr.mxu0 0.0
        %488 = vmatpush1.msra.mxu0 0.0
        %489 = vmatprep.subr.mxu0 0.0
        %490 = vmatpush1.msra.mxu0 0.0
        %491 = vmatprep.subr.mxu0 0.0
        %492 = vmatpush1.msra.mxu0 0.0
        %493 = vmatprep.mubr.f32.mxu0 0.0
        %494 = vmatmul.mubr.f32.gmra.mrb[0].mxu0 %v427
        %v495 = vpop.f32.mrb[0].mxu0
        %v496 = vadd.f32 %v424, %v495
        %v497 = vpop.f32.mrb[0].mxu0
        %498 = vdwg.mxu0
        %v499 = vmul.f32 %v496, 1.442695
        %v500 = vpow.pop %v499
        %502 = vrot.lane.b32.xlu0 %v307, 44
        %v503 = vpop.permute.xlu0 %502
        %v505 = vmul.f32 %v500, %v503
        %507 = vrot.lane.b32.xlu0 %v505, 64
        %v508 = vpop.permute.xlu0 %507
        %v510 = vadd.f32 %v496, %v508
        %vm511 = vcmask 7168
        %512 = vst.msk [vmem:[%s305] sm:$0xff] %vm511, %v510
        %p513 = scmp.lt.s32.totalorder %s23, 1
        %s514 = scalar_select %p513, %s23, 1
        %s515 = smul.addr %s514, 8
        %s516 = scalar_lea.vmem %s5, %s515
        // Predicated region
        $region57: #{tpu_custom_call.1} parent=39 // pred_check
          %p517 = pneg %p156
        $region58: #{tpu_custom_call.1} parent=39 // pred_check_branch
          %519 = sbr.rel (%p517) target = $region60
        $region59: #{tpu_custom_call.1} parent=39 // pred_region
          _
        $region60: #{tpu_custom_call.1} parent=39 // pred_fallthru
          _
      $region40: #{tpu_custom_call.1} parent=5 // pred_fallthru
        _
      %p520 = scmp.le.s32.totalorder 2, %s18
      // Predicated region
      $region61: #{tpu_custom_call.1} parent=5 // pred_check
        %p521 = pneg %p520
      $region62: #{tpu_custom_call.1} parent=5 // pred_check_branch
        %523 = sbr.rel (%p521) target = $region64
      $region63: #{tpu_custom_call.1} parent=5 // pred_region
        %s524 = ssub.s32 %s18, 2
        // Predicated region
        $region65: #{tpu_custom_call.1} parent=63 // pred_check
          %p525 = pneg %p162
        $region66: #{tpu_custom_call.1} parent=63 // pred_check_branch
          %527 = sbr.rel (%p525) target = $region68
        $region67: #{tpu_custom_call.1} parent=63 // pred_region
          %p528 = scmp.lt.s32.totalorder %s24, 1
          %s529 = scalar_select %p528, %s24, 1
          %s530 = smul.addr %s529, 8
          %s531 = scalar_lea.vmem %s5, %s530
        $region68: #{tpu_custom_call.1} parent=63 // pred_fallthru
          _
      $region64: #{tpu_custom_call.1} parent=5 // pred_fallthru
        _
    $region6: #{tpu_custom_call.1} parent=1 // loop_footer
      %s22 = sadd.s32 1, %s18
    $region7: #{tpu_custom_call.1} parent=1 // loop_footer_branch
      %17 = sbr.rel target = $region3
    $region8: #{tpu_custom_call.1} parent=1 // loop_exit
      _
    %532 = vsyncpa [#allocation3], 1
    %s533 = scalar_lea.sflag [#allocation3], 1
    %534 = vsyncpa %s533, 1
    %535 = vsyncpa [#allocation5], 1
    %536 = vsyncpa [#allocation8], 1
    %s537 = scalar_lea.sflag [#allocation8], 1
    %538 = vsyncpa %s537, 1

</llo_original>
